<compile_context>
chip_gen: v7x
topology: tpu7x:2x2x1
jax: 0.10.0
libtpu: 0.0.40
codegen_flags: <defaults>
</compile_context>

<pallas_src>
import functools

import jax
import jax.numpy as jnp
from jax.experimental import pallas as pl
from jax.experimental.pallas import tpu as pltpu


def _round_up(x, m):
    return ((x + m - 1) // m) * m


# ----------------------------- Pallas kernel --------------------------------
def _dconv_kernel(x_ref, w_ref, b_ref, o_ref, *, q, th, wo_pad, cpk, c_out_pad):
    """One (batch, H-tile) block of leaky_relu(conv2d(x, W_sn) + b, 0.2).

    x_ref: (1, 1, TH+q-1, Wq_pad, s*s*Cin) bf16  phase-interleaved input tile
                                                  (channel axis = (rh, rw, c))
    w_ref: (q*q*s*s*Cin, Cpad)             bf16  taps folded onto the K axis
                                                  (K axis = (qh, qw, rh, rw, c))
    b_ref: (1, Cpad)                       f32   bias (lane-padded)
    o_ref: (1, TH, Wo_pad, Cpad)           bf16  output tile (lane-dense)
    """
    # Build the per-tile patch LHS: lane-concatenate the q*q spatially shifted
    # (qh, qw) views.  Each view is a static slice of the VMEM-resident tile;
    # the concat makes the contraction lane-dense (K = q*q*s*s*Cin).
    pieces = []
    for qh in range(q):
        for qw in range(q):
            pieces.append(x_ref[0, 0, qh:qh + th, qw:qw + wo_pad, :])
    lhs = jnp.concatenate(pieces, axis=-1)             # (TH, Wo_pad, q*q*cpk)
    lhs = lhs.reshape(th * wo_pad, q * q * cpk)        # Wo_pad % 8 == 0

    # Entire tile = ONE MXU matmul with a deep contraction (no tap loop, no
    # per-tap f32 accumulate passes).
    acc = jnp.dot(lhs, w_ref[...], preferred_element_type=jnp.float32)
    acc = acc + b_ref[...]                              # (1, Cpad) broadcast
    acc = jnp.where(acc >= 0.0, acc, 0.2 * acc)         # LeakyReLU(0.2)
    o_ref[0] = acc.reshape(th, wo_pad, c_out_pad).astype(o_ref.dtype)


# ------------------------------- Wrapper -------------------------------------
def _conv_sn_lrelu_pallas(x_nchw, w_sn, bias, *, ksize, stride, pad):
    n, c_in, h, w = x_nchw.shape
    c_out = w_sn.shape[0]
    s, k = stride, ksize

    ho = (h + 2 * pad - k) // s + 1
    wo = (w + 2 * pad - k) // s + 1
    assert ho > 0 and wo > 0, "conv output must be non-empty"

    qmax = (k - 1) // s            # taps split as kh = qh*s + rh, qh in [0, q)
    q = qmax + 1
    cpk = s * s * c_in             # channels after (rh, rw) phase interleave
    kdim = q * q * cpk             # contraction depth of the fused patch matmul

    c_out_pad = _round_up(c_out, 128)     # lane-dense MXU N / unmasked stores
    wo_pad = _round_up(wo, 8)             # full-sublane output rows
    wq_pad = _round_up(wo_pad + qmax, 8)  # phase-plane width (carries qw halo)

    # H tile: target ~1024 matmul rows per grid step (review: raise from 512);
    # make sure the grid exposes >= 2 parallel steps for 2-TC parts.
    th = max(1, min(ho, 1024 // wo_pad))
    if n * ((ho + th - 1) // th) < 2 and ho > 1:
        th = (ho + 1) // 2
    n_th = (ho + th - 1) // th
    ho_pad = n_th * th
    hq = ho_pad + qmax                    # phase-plane height (carries qh halo)
    hp, wp = s * hq, s * wq_pad           # padded input extents
    # Padded extents always cover the receptive field of every real output.
    assert hp >= (ho - 1) * s + k and wp >= (wo - 1) * s + k

    # --- input relayout (XLA fuses the layout chain) -------------------------
    # NCHW -> NHWC bf16, zero-pad, then stride x stride phase interleave onto
    # the channel axis:  x_pack[n, hq, wq, (rh, rw, c)] = x_sp[n, hq*s+rh, wq*s+rw, c]
    x_nhwc = jnp.transpose(x_nchw, (0, 2, 3, 1)).astype(jnp.bfloat16)
    x_sp = jnp.pad(x_nhwc, ((0, 0),
                            (pad, max(0, hp - h - pad)),
                            (pad, max(0, wp - w - pad)),
                            (0, 0)))[:, :hp, :wp, :]
    x_pack = x_sp.reshape(n, hq, s, wq_pad, s, c_in)
    x_pack = x_pack.transpose(0, 1, 3, 2, 4, 5).reshape(n, hq, wq_pad, cpk)
    # H-tiling with a qmax-row halo so every grid step reads an independent,
    # VMEM-sized block (VMEM ~ tile; mandatory for v7x's 64 MiB).
    row_idx = (jnp.arange(n_th)[:, None] * th
               + jnp.arange(th + qmax)[None, :]).reshape(-1)
    x_tiles = jnp.take(x_pack, row_idx, axis=1)
    x_tiles = x_tiles.reshape(n, n_th, th + qmax, wq_pad, cpk)

    # --- weight relayout: taps folded onto K -> one (kdim, Cpad) bf16 block --
    # zero-extend the k x k kernel to (q*s) x (q*s) so kh = qh*s + rh is always
    # a valid (possibly zero) tap, then order K as (qh, qw, rh, rw, c).
    w_ext = jnp.pad(w_sn, ((0, 0), (0, 0), (0, q * s - k), (0, q * s - k)))
    w_ext = w_ext.reshape(c_out, c_in, q, s, q, s)          # (co, c, qh, rh, qw, rw)
    w_pack = jnp.transpose(w_ext, (2, 4, 3, 5, 1, 0))       # (qh, qw, rh, rw, c, co)
    w_pack = w_pack.reshape(kdim, c_out)
    w_pack = jnp.pad(w_pack, ((0, 0), (0, c_out_pad - c_out))).astype(jnp.bfloat16)
    b_pad = jnp.pad(bias.astype(jnp.float32),
                    (0, c_out_pad - c_out)).reshape(1, c_out_pad)

    kernel = functools.partial(_dconv_kernel, q=q, th=th, wo_pad=wo_pad,
                               cpk=cpk, c_out_pad=c_out_pad)

    # Honest advisory cost (real output extent, not the padded one).
    flops = 2 * n * ho * wo * c_in * c_out * k * k
    bytes_accessed = (x_tiles.size * 2 + w_pack.size * 2 + b_pad.size * 4
                      + n * ho_pad * wo_pad * c_out_pad * 2)

    # VMEM budget re-derived per generation (128 MiB v5e/v6e vs 64 MiB v7x).
    try:
        vmem_cap = int(pltpu.get_tpu_info().vmem_capacity_bytes)
    except Exception:
        vmem_cap = 128 * 1024 * 1024
    vmem_limit = min(int(0.45 * vmem_cap), 64 * 1024 * 1024)
    vmem_limit = max(vmem_limit, 16 * 1024 * 1024)

    out = pl.pallas_call(
        kernel,
        out_shape=jax.ShapeDtypeStruct((n, ho_pad, wo_pad, c_out_pad),
                                       jnp.bfloat16),
        grid=(n, n_th),
        in_specs=[
            pl.BlockSpec((1, 1, th + qmax, wq_pad, cpk),
                         lambda i, j: (i, j, 0, 0, 0)),
            # TODO(synk): weight/bias blocks are grid-invariant; single
            # buffering (pl.Buffered(1)) would drop their redundant 2nd buffer.
            pl.BlockSpec((kdim, c_out_pad), lambda i, j: (0, 0)),
            pl.BlockSpec((1, c_out_pad), lambda i, j: (0, 0)),
        ],
        out_specs=pl.BlockSpec((1, th, wo_pad, c_out_pad),
                               lambda i, j: (i, j, 0, 0)),
        compiler_params=pltpu.CompilerParams(
            dimension_semantics=("parallel", "parallel"),
            vmem_limit_bytes=vmem_limit),
        cost_estimate=pl.CostEstimate(flops=flops, transcendentals=0,
                                      bytes_accessed=bytes_accessed),
    )(x_tiles, w_pack, b_pad)

    out = out[:, :ho, :wo, :c_out].astype(jnp.float32)   # drop padding
    return jnp.transpose(out, (0, 3, 1, 2))               # NHWC -> NCHW


# --------------------------- Spectral norm (JAX) ------------------------------
def _l2_normalize(x, eps=1e-12):
    # matches F.normalize(x, p=2, dim=0, eps)
    nrm = jnp.sqrt(jnp.sum(x * x, axis=0, keepdims=True))
    return x / jnp.maximum(nrm, eps)


def spectral_normalize_weight(weight, weight_u, n_iter=1, eps=1e-12):
    """weight: (Cout, Cin, k, k), weight_u: (Cout, 1). Returns weight / sigma."""
    c_out = weight.shape[0]
    w = weight.reshape(c_out, -1)
    u = weight_u
    v = None
    for _ in range(n_iter):
        v = _l2_normalize(w.T @ u, eps)
        u = _l2_normalize(w @ v, eps)
    sigma = (u.T @ w @ v)[0, 0]
    return weight / sigma


@functools.partial(jax.jit, static_argnames=("ksize", "stride", "pad"))
def dconv_forward(x, weight, bias, weight_u, *, ksize=5, stride=2, pad=2):
    """DConv.forward: spectral-norm conv2d + LeakyReLU(0.2). x is NCHW."""
    w_sn = spectral_normalize_weight(weight, weight_u)
    return _conv_sn_lrelu_pallas(x, w_sn, bias, ksize=ksize, stride=stride, pad=pad)


# --------------------------------- main --------------------------------------
if __name__ == "__main__":
    key = jax.random.PRNGKey(0)
    k_x, k_w, k_b, k_u = jax.random.split(key, 4)

    N, C_IN, H, W = 2, 4, 16, 16
    C_OUT, KSIZE, STRIDE = 8, 5, 2
    PAD = (KSIZE - 1) // 2

    x = jax.random.normal(k_x, (N, C_IN, H, W), dtype=jnp.float32)
    weight = jax.random.normal(k_w, (C_OUT, C_IN, KSIZE, KSIZE), dtype=jnp.float32) * 0.1
    bias = jax.random.normal(k_b, (C_OUT,), dtype=jnp.float32) * 0.1
    weight_u = jax.random.normal(k_u, (C_OUT, 1), dtype=jnp.float32)

    out = dconv_forward(x, weight, bias, weight_u,
                        ksize=KSIZE, stride=STRIDE, pad=PAD)
    out = jax.block_until_ready(out)

    # Pure-JAX reference (lax conv) with the same bf16 operand rounding the
    # kernel uses for its MXU matmul.
    w_sn = spectral_normalize_weight(weight, weight_u)
    x_b = x.astype(jnp.bfloat16).astype(jnp.float32)
    w_b = w_sn.astype(jnp.bfloat16).astype(jnp.float32)
    ref = jax.lax.conv_general_dilated(
        x_b, w_b, window_strides=(STRIDE, STRIDE),
        padding=[(PAD, PAD), (PAD, PAD)],
        dimension_numbers=("NCHW", "OIHW", "NCHW"),
    ) + bias.reshape(1, -1, 1, 1)
    ref = jnp.where(ref >= 0.0, ref, 0.2 * ref)

    Ho = (H + 2 * PAD - KSIZE) // STRIDE + 1
    Wo = (W + 2 * PAD - KSIZE) // STRIDE + 1
    assert out.shape == (N, C_OUT, Ho, Wo)
    assert jnp.allclose(out, ref, atol=2e-2, rtol=2e-2), \
        float(jnp.max(jnp.abs(out - ref)))

    print("KERNEL_OK")
</pallas_src>

<mosaic_0001>
module attributes {stable_mosaic.version = 11 : i64} {
  func.func @_dconv_kernel(%arg0: i32, %arg1: i32, %arg2: memref<1x1x10x16x16xbf16, #tpu.memory_space<vmem>>, %arg3: memref<144x128xbf16, #tpu.memory_space<vmem>>, %arg4: memref<1x128xf32, #tpu.memory_space<vmem>>, %arg5: memref<1x8x8x128xbf16, #tpu.memory_space<vmem>>) attributes {dimension_semantics = [#tpu.dimension_semantics<parallel>, #tpu.dimension_semantics<parallel>], iteration_bounds = array<i64: 2, 1>, scalar_prefetch = 0 : i64, scratch_operands = 0 : i64, tpu.core_type = #tpu.core_type<tc>, window_params = [{transform_indices = @transform_0, window_bounds = array<i64: 1, 1, 10, 16, 16>}, {pipeline_mode = #tpu.pipeline_mode<synchronous>, transform_indices = @transform_1, window_bounds = array<i64: 144, 128>}, {pipeline_mode = #tpu.pipeline_mode<synchronous>, transform_indices = @transform_2, window_bounds = array<i64: 1, 128>}, {transform_indices = @transform_3, window_bounds = array<i64: 1, 8, 8, 128>}]} {
    %c0 = arith.constant 0 : index
    %c0_0 = arith.constant 0 : index
    %c0_1 = arith.constant 0 : index
    %c0_2 = arith.constant 0 : index
    %c0_3 = arith.constant 0 : index
    %0 = vector.load %arg2[%c0, %c0_0, %c0_1, %c0_2, %c0_3] : memref<1x1x10x16x16xbf16, #tpu.memory_space<vmem>>, vector<1x1x8x8x16xbf16>
    %1 = vector.shape_cast %0 : vector<1x1x8x8x16xbf16> to vector<8x8x16xbf16>
    %c0_4 = arith.constant 0 : index
    %c0_5 = arith.constant 0 : index
    %c0_6 = arith.constant 0 : index
    %c1 = arith.constant 1 : index
    %c0_7 = arith.constant 0 : index
    %2 = vector.load %arg2[%c0_4, %c0_5, %c0_6, %c1, %c0_7] : memref<1x1x10x16x16xbf16, #tpu.memory_space<vmem>>, vector<1x1x8x8x16xbf16>
    %3 = vector.shape_cast %2 : vector<1x1x8x8x16xbf16> to vector<8x8x16xbf16>
    %c0_8 = arith.constant 0 : index
    %c0_9 = arith.constant 0 : index
    %c0_10 = arith.constant 0 : index
    %c2 = arith.constant 2 : index
    %c0_11 = arith.constant 0 : index
    %4 = vector.load %arg2[%c0_8, %c0_9, %c0_10, %c2, %c0_11] : memref<1x1x10x16x16xbf16, #tpu.memory_space<vmem>>, vector<1x1x8x8x16xbf16>
    %5 = vector.shape_cast %4 : vector<1x1x8x8x16xbf16> to vector<8x8x16xbf16>
    %c0_12 = arith.constant 0 : index
    %c0_13 = arith.constant 0 : index
    %c1_14 = arith.constant 1 : index
    %c0_15 = arith.constant 0 : index
    %c0_16 = arith.constant 0 : index
    %6 = vector.load %arg2[%c0_12, %c0_13, %c1_14, %c0_15, %c0_16] : memref<1x1x10x16x16xbf16, #tpu.memory_space<vmem>>, vector<1x1x8x8x16xbf16>
    %7 = vector.shape_cast %6 : vector<1x1x8x8x16xbf16> to vector<8x8x16xbf16>
    %c0_17 = arith.constant 0 : index
    %c0_18 = arith.constant 0 : index
    %c1_19 = arith.constant 1 : index
    %c1_20 = arith.constant 1 : index
    %c0_21 = arith.constant 0 : index
    %8 = vector.load %arg2[%c0_17, %c0_18, %c1_19, %c1_20, %c0_21] : memref<1x1x10x16x16xbf16, #tpu.memory_space<vmem>>, vector<1x1x8x8x16xbf16>
    %9 = vector.shape_cast %8 : vector<1x1x8x8x16xbf16> to vector<8x8x16xbf16>
    %c0_22 = arith.constant 0 : index
    %c0_23 = arith.constant 0 : index
    %c1_24 = arith.constant 1 : index
    %c2_25 = arith.constant 2 : index
    %c0_26 = arith.constant 0 : index
    %10 = vector.load %arg2[%c0_22, %c0_23, %c1_24, %c2_25, %c0_26] : memref<1x1x10x16x16xbf16, #tpu.memory_space<vmem>>, vector<1x1x8x8x16xbf16>
    %11 = vector.shape_cast %10 : vector<1x1x8x8x16xbf16> to vector<8x8x16xbf16>
    %c0_27 = arith.constant 0 : index
    %c0_28 = arith.constant 0 : index
    %c2_29 = arith.constant 2 : index
    %c0_30 = arith.constant 0 : index
    %c0_31 = arith.constant 0 : index
    %12 = vector.load %arg2[%c0_27, %c0_28, %c2_29, %c0_30, %c0_31] : memref<1x1x10x16x16xbf16, #tpu.memory_space<vmem>>, vector<1x1x8x8x16xbf16>
    %13 = vector.shape_cast %12 : vector<1x1x8x8x16xbf16> to vector<8x8x16xbf16>
    %c0_32 = arith.constant 0 : index
    %c0_33 = arith.constant 0 : index
    %c2_34 = arith.constant 2 : index
    %c1_35 = arith.constant 1 : index
    %c0_36 = arith.constant 0 : index
    %14 = vector.load %arg2[%c0_32, %c0_33, %c2_34, %c1_35, %c0_36] : memref<1x1x10x16x16xbf16, #tpu.memory_space<vmem>>, vector<1x1x8x8x16xbf16>
    %15 = vector.shape_cast %14 : vector<1x1x8x8x16xbf16> to vector<8x8x16xbf16>
    %c0_37 = arith.constant 0 : index
    %c0_38 = arith.constant 0 : index
    %c2_39 = arith.constant 2 : index
    %c2_40 = arith.constant 2 : index
    %c0_41 = arith.constant 0 : index
    %16 = vector.load %arg2[%c0_37, %c0_38, %c2_39, %c2_40, %c0_41] : memref<1x1x10x16x16xbf16, #tpu.memory_space<vmem>>, vector<1x1x8x8x16xbf16>
    %17 = vector.shape_cast %16 : vector<1x1x8x8x16xbf16> to vector<8x8x16xbf16>
    %18 = tpu.concatenate %1, %3, %5, %7, %9, %11, %13, %15, %17 in 2 : vector<8x8x16xbf16>, vector<8x8x16xbf16>, vector<8x8x16xbf16>, vector<8x8x16xbf16>, vector<8x8x16xbf16>, vector<8x8x16xbf16>, vector<8x8x16xbf16>, vector<8x8x16xbf16>, vector<8x8x16xbf16> -> vector<8x8x144xbf16>
    %19 = vector.shape_cast %18 : vector<8x8x144xbf16> to vector<64x144xbf16>
    %c0_42 = arith.constant 0 : index
    %c0_43 = arith.constant 0 : index
    %20 = vector.load %arg3[%c0_42, %c0_43] : memref<144x128xbf16, #tpu.memory_space<vmem>>, vector<144x128xbf16>
    %cst = arith.constant dense<0.000000e+00> : vector<64x128xf32>
    %21 = tpu.matmul %19, %20, %cst {dimension_numbers = #tpu.dot_dimension_numbers<[1], [0], [0], [1], [0, 0, 1, 1], [], []>} : vector<64x144xbf16>, vector<144x128xbf16>, vector<64x128xf32> -> vector<64x128xf32>
    %c0_44 = arith.constant 0 : index
    %c0_45 = arith.constant 0 : index
    %22 = vector.load %arg4[%c0_44, %c0_45] : memref<1x128xf32, #tpu.memory_space<vmem>>, vector<1x128xf32>
    %23 = vector.broadcast %22 : vector<1x128xf32> to vector<64x128xf32>
    %24 = arith.addf %21, %23 : vector<64x128xf32>
    %cst_46 = arith.constant 0.000000e+00 : f32
    %25 = vector.broadcast %cst_46 : f32 to vector<64x128xf32>
    %26 = arith.cmpf oge, %24, %25 : vector<64x128xf32>
    %cst_47 = arith.constant 2.000000e-01 : f32
    %27 = vector.broadcast %cst_47 : f32 to vector<64x128xf32>
    %28 = arith.mulf %27, %24 : vector<64x128xf32>
    %29 = arith.select %26, %24, %28 : vector<64x128xi1>, vector<64x128xf32>
    %30 = vector.shape_cast %29 : vector<64x128xf32> to vector<8x8x128xf32>
    %31 = arith.truncf %30 : vector<8x8x128xf32> to vector<8x8x128xbf16>
    %c0_48 = arith.constant 0 : index
    %c0_49 = arith.constant 0 : index
    %c0_50 = arith.constant 0 : index
    %c0_51 = arith.constant 0 : index
    %32 = vector.load %arg5[%c0_48, %c0_49, %c0_50, %c0_51] : memref<1x8x8x128xbf16, #tpu.memory_space<vmem>>, vector<1x8x8x128xbf16>
    %33 = vector.shape_cast %32 : vector<1x8x8x128xbf16> to vector<8x8x128xbf16>
    %34 = vector.shape_cast %31 : vector<8x8x128xbf16> to vector<1x8x8x128xbf16>
    tpu.vector_store %arg5[%c0_48, %c0_49, %c0_50, %c0_51], %34 {strides = array<i32>} : memref<1x8x8x128xbf16, #tpu.memory_space<vmem>>, vector<1x8x8x128xbf16>,
    return
  }
  func.func @transform_0(%arg0: i32, %arg1: i32) -> (i32, i32, i32, i32, i32) {
    %c0_i32 = arith.constant 0 : i32
    %c0_i32_0 = arith.constant 0 : i32
    %c0_i32_1 = arith.constant 0 : i32
    %c0_i32_2 = arith.constant 0 : i32
    return %arg0, %arg1, %c0_i32, %c0_i32_0, %c0_i32_1 : i32, i32, i32, i32, i32
  }
  func.func @transform_1(%arg0: i32, %arg1: i32) -> (i32, i32) {
    %c0_i32 = arith.constant 0 : i32
    %c0_i32_0 = arith.constant 0 : i32
    %c0_i32_1 = arith.constant 0 : i32
    return %c0_i32, %c0_i32_0 : i32, i32
  }
  func.func @transform_2(%arg0: i32, %arg1: i32) -> (i32, i32) {
    %c0_i32 = arith.constant 0 : i32
    %c0_i32_0 = arith.constant 0 : i32
    %c0_i32_1 = arith.constant 0 : i32
    return %c0_i32, %c0_i32_0 : i32, i32
  }
  func.func @transform_3(%arg0: i32, %arg1: i32) -> (i32, i32, i32, i32) {
    %c0_i32 = arith.constant 0 : i32
    %c0_i32_0 = arith.constant 0 : i32
    %c0_i32_1 = arith.constant 0 : i32
    return %arg0, %arg1, %c0_i32, %c0_i32_0 : i32, i32, i32, i32
  }
}

</mosaic_0001>

<llo_original>
// kernel: dconv_forward.1
$region0: #{dconv_forward.1}
  #allocation0 [shape = 'u32[]', space=smem, size = 0x4, offset = 0x4, fixed_abs, tag = 'smem constant byte address 0x4 - core index']
  #allocation1 [shape = 'u32[144,128]{1,0:T(1,128)}', space=vmem, size = 0x12000, scoped, tag = 'internal scratch']
  %s0 = inlined_call_operand.vmem [shape: bf16[2,1,10,16,16], index: 0, kind: input, shape index: {}]
  %s1 = inlined_call_operand.vmem [shape: bf16[144,128], index: 1, kind: input, shape index: {}]
  %s2 = inlined_call_operand.vmem [shape: f32[1,128], index: 2, kind: input, shape index: {}]
  %s3 = inlined_call_operand.vmem [shape: bf16[2,8,8,128], index: 3, kind: output, shape index: {}]
  %s4 = sld [smem:[#allocation0]]
  $region45: #{dconv_forward.1} parent=0
    _
  %s6 = ssub.s32 1, %s4
  %s7 = scalar_select 0, %s6, %s4
  loop: start=0, step=1, limit=4
  $region2: #{dconv_forward.1} parent=0 // loop_pre_header
    _
  $region3: #{dconv_forward.1} parent=0 // loop_header
    %s9 = sphi 0, %s13
    %p10 = scmp.ge.s32.totalorder %s9, 4
    %s16 = sphi 0, %s28
    %s17 = sphi 0, %s24
    %s18 = sphi 0, %s16
    %s19 = sphi 0, %s17
    %s20 = sphi 0, %s18
    %s21 = sphi 0, %s19
    %s33 = sphi 0, %s35
    %s36 = sphi 0, %s33
    %s37 = sphi 0, %s36
    %s53 = sphi 0, %s37
    %s57 = sphi 0, %s57
    %s59 = sphi 0, %s57
    %s60 = sphi 0, %s59
    %s74 = sphi 0, %s60
    %s78 = sphi 0, %s78
    %s80 = sphi 0, %s78
    %s81 = sphi 0, %s80
    %s95 = sphi 0, %s81
    %s103 = sphi 0, %s105
    %s106 = sphi 0, %s103
    %s107 = sphi 0, %s106
    %s123 = sphi 0, %s107
  $region4: #{dconv_forward.1} parent=0 // loop_header_branch
    %12 = sbr.rel (%p10) target = $region8
  $region5: #{dconv_forward.1} parent=0 // loop_body
    %s14 = ssub.s32 %s9, 1
    %s15 = ssub.s32 %s9, 2
    %s22 = sadd.s32 1, %s17
    %p23 = scmp.ge.s32.totalorder %s22, 1
    %s24 = scalar_select %p23, 0, %s22
    %s25 = sadd.s32 1, %s16
    %s26 = scalar_select %p23, %s25, %s16
    %p27 = scmp.ge.s32.totalorder %s26, 2
    %s28 = scalar_select %p27, 0, %s26
    %s29 = ssub.s32 %s16, %s28
    %s30 = ssub.s32 %s17, %s24
    %s31 = sor.u32 %s29, %s30
    %p32 = scmp.eq.s32.totalorder %s31, 0
    %s34 = sadd.s32 %s33, 1
    %s35 = scalar_select %p32, %s33, %s34
    %p38 = pneg %p32
    %p39 = scmp.eq.s32.totalorder %s9, 1
    %p40 = por %p38, %p39
    %p41 = scmp.ne.s32.totalorder %s33, %s36
    %p42 = scmp.eq.s32.totalorder %s9, 0
    %p43 = por %p41, %p42
    %p44 = scmp.ne.s32.totalorder %s33, %s36
    %p45 = scmp.eq.s32.totalorder %s14, 1
    %p46 = por %p44, %p45
    %p47 = scmp.ne.s32.totalorder %s36, %s37
    %p48 = scmp.eq.s32.totalorder %s14, 0
    %p49 = por %p47, %p48
    %p50 = scmp.ne.s32.totalorder %s36, %s37
    %p51 = scmp.eq.s32.totalorder %s15, 1
    %p52 = por %p50, %p51
    %p54 = scmp.ne.s32.totalorder %s37, %s53
    %p55 = scmp.eq.s32.totalorder %s15, 0
    %p56 = por %p54, %p55
    %s58 = sadd.s32 %s57, 1
    %p61 = scmp.eq.s32.totalorder %s9, 1
    %p62 = scmp.ne.s32.totalorder %s57, %s59
    %p63 = scmp.eq.s32.totalorder %s9, 0
    %p64 = por %p62, %p63
    %p65 = scmp.ne.s32.totalorder %s57, %s59
    %p66 = scmp.eq.s32.totalorder %s14, 1
    %p67 = por %p65, %p66
    %p68 = scmp.ne.s32.totalorder %s59, %s60
    %p69 = scmp.eq.s32.totalorder %s14, 0
    %p70 = por %p68, %p69
    %p71 = scmp.ne.s32.totalorder %s59, %s60
    %p72 = scmp.eq.s32.totalorder %s15, 1
    %p73 = por %p71, %p72
    %p75 = scmp.ne.s32.totalorder %s60, %s74
    %p76 = scmp.eq.s32.totalorder %s15, 0
    %p77 = por %p75, %p76
    %s79 = sadd.s32 %s78, 1
    %p82 = scmp.eq.s32.totalorder %s9, 1
    %p83 = scmp.ne.s32.totalorder %s78, %s80
    %p84 = scmp.eq.s32.totalorder %s9, 0
    %p85 = por %p83, %p84
    %p86 = scmp.ne.s32.totalorder %s78, %s80
    %p87 = scmp.eq.s32.totalorder %s14, 1
    %p88 = por %p86, %p87
    %p89 = scmp.ne.s32.totalorder %s80, %s81
    %p90 = scmp.eq.s32.totalorder %s14, 0
    %p91 = por %p89, %p90
    %p92 = scmp.ne.s32.totalorder %s80, %s81
    %p93 = scmp.eq.s32.totalorder %s15, 1
    %p94 = por %p92, %p93
    %p96 = scmp.ne.s32.totalorder %s81, %s95
    %p97 = scmp.eq.s32.totalorder %s15, 0
    %p98 = por %p96, %p97
    %s99 = ssub.s32 %s16, %s28
    %s100 = ssub.s32 %s17, %s24
    %s101 = sor.u32 %s99, %s100
    %p102 = scmp.eq.s32.totalorder %s101, 0
    %s104 = sadd.s32 %s103, 1
    %s105 = scalar_select %p102, %s103, %s104
    %p108 = pneg %p102
    %p109 = scmp.eq.s32.totalorder %s9, 1
    %p110 = por %p108, %p109
    %p111 = scmp.ne.s32.totalorder %s103, %s106
    %p112 = scmp.eq.s32.totalorder %s9, 0
    %p113 = por %p111, %p112
    %p114 = scmp.ne.s32.totalorder %s103, %s106
    %p115 = scmp.eq.s32.totalorder %s14, 1
    %p116 = por %p114, %p115
    %p117 = scmp.ne.s32.totalorder %s106, %s107
    %p118 = scmp.eq.s32.totalorder %s14, 0
    %p119 = por %p117, %p118
    %p120 = scmp.ne.s32.totalorder %s106, %s107
    %p121 = scmp.eq.s32.totalorder %s15, 1
    %p122 = por %p120, %p121
    %p124 = scmp.ne.s32.totalorder %s107, %s123
    %p125 = scmp.eq.s32.totalorder %s15, 0
    %p126 = por %p124, %p125
    %p127 = scmp.le.s32.totalorder 1, %s9
    %p128 = scmp.lt.s32.totalorder %s9, 3
    %p129 = pnand %p127, %p128
    %p130 = pneg %p129
    // Predicated region
    $region9: #{dconv_forward.1} parent=5 // pred_check
      _
    $region10: #{dconv_forward.1} parent=5 // pred_check_branch
      %132 = sbr.rel (%p129) target = $region12
    $region11: #{dconv_forward.1} parent=5 // pred_region
      %s133 = ssub.s32 %s9, 1
      // Predicated region
      $region13: #{dconv_forward.1} parent=11 // pred_check
        %p134 = pneg %p70
      $region14: #{dconv_forward.1} parent=11 // pred_check_branch
        %136 = sbr.rel (%p134) target = $region16
      $region15: #{dconv_forward.1} parent=11 // pred_region
        _
      $region16: #{dconv_forward.1} parent=11 // pred_fallthru
        _
      // Predicated region
      $region17: #{dconv_forward.1} parent=11 // pred_check
        %p137 = pneg %p91
      $region18: #{dconv_forward.1} parent=11 // pred_check_branch
        %139 = sbr.rel (%p137) target = $region20
      $region19: #{dconv_forward.1} parent=11 // pred_region
        _
      $region20: #{dconv_forward.1} parent=11 // pred_fallthru
        _
    $region12: #{dconv_forward.1} parent=5 // pred_fallthru
      _
    %p140 = scmp.lt.s32.totalorder %s9, 2
    // Predicated region
    $region21: #{dconv_forward.1} parent=5 // pred_check
      %p141 = pneg %p140
    $region22: #{dconv_forward.1} parent=5 // pred_check_branch
      %143 = sbr.rel (%p141) target = $region24
    $region23: #{dconv_forward.1} parent=5 // pred_region
      // Predicated region
      $region25: #{dconv_forward.1} parent=23 // pred_check
        %p144 = pneg %p43
      $region26: #{dconv_forward.1} parent=23 // pred_check_branch
        %146 = sbr.rel (%p144) target = $region28
      $region27: #{dconv_forward.1} parent=23 // pred_region
        %p147 = scmp.lt.s32.totalorder %s16, 1
        %s148 = scalar_select %p147, %s16, 1
        %p149 = scmp.lt.s32.totalorder %s17, 0
        %s150 = scalar_select %p149, %s17, 0
        %s151 = smul.addr %s150, 20
        %s152 = smul.addr %s148, 20
        %s153 = sadd.s32 %s151, %s152
        %s154 = smul.addr %s153, 4
        %s155 = scalar_lea.vmem %s0, %s154
      $region28: #{dconv_forward.1} parent=23 // pred_fallthru
        _
    $region24: #{dconv_forward.1} parent=5 // pred_fallthru
      _
    %p156 = scmp.le.s32.totalorder 1, %s9
    %p157 = scmp.lt.s32.totalorder %s9, 3
    %p158 = pnand %p156, %p157
    %p159 = pneg %p158
    // Predicated region
    $region29: #{dconv_forward.1} parent=5 // pred_check
      _
    $region30: #{dconv_forward.1} parent=5 // pred_check_branch
      %161 = sbr.rel (%p158) target = $region32
    $region31: #{dconv_forward.1} parent=5 // pred_region
      %s162 = ssub.s32 %s9, 1
      %p163 = scmp.lt.s32.totalorder %s18, 1
      %s164 = scalar_select %p163, %s18, 1
      %p165 = scmp.lt.s32.totalorder %s19, 0
      %s166 = scalar_select %p165, %s19, 0
      %s167 = smul.addr %s166, 20
      %s168 = smul.addr %s164, 20
      %s169 = sadd.s32 %s167, %s168
      %s170 = smul.addr %s169, 4
      %s171 = scalar_lea.vmem %s0, %s170
      %p172 = pneg %p49
      %p173 = pneg %p46
      %p174 = pneg %p70
      %p175 = pneg %p67
      %p176 = pneg %p91
      %p177 = pneg %p88
      %p178 = pneg %p119
      %p179 = pneg %p116
      %s180 = smul.u32 8, %s19
      %p181 = scmp.lt.s32.totalorder %s18, 1
      %s182 = scalar_select %p181, %s18, 1
      %p183 = scmp.lt.s32.totalorder %s180, 7
      %s184 = scalar_select %p183, %s180, 7
      %s185 = smul.addr %s182, 8
      %s186 = sadd.s32 %s184, %s185
      %s187 = smul.addr %s186, 4
      %s188 = scalar_lea.vmem %s3, %s187
      %p189 = scmp.lt.s32.totalorder %s18, 1
      %s190 = scalar_select %p189, %s18, 1
      %p191 = scmp.lt.s32.totalorder %s19, 0
      %s192 = scalar_select %p191, %s19, 0
      %s193 = smul.addr %s192, 20
      %s194 = smul.addr %s190, 20
      %s195 = sadd.s32 %s193, %s194
      %s196 = smul.addr %s195, 4
      %s197 = scalar_lea.vmem %s0, %s196
      %s198 = smul.u32 8, %s19
      %p199 = scmp.lt.s32.totalorder %s18, 1
      %s200 = scalar_select %p199, %s18, 1
      %p201 = scmp.lt.s32.totalorder %s198, 7
      %s202 = scalar_select %p201, %s198, 7
      %s203 = smul.addr %s200, 8
      %s204 = sadd.s32 %s202, %s203
      %s205 = smul.addr %s204, 4
      %s206 = scalar_lea.vmem %s3, %s205
      %s207 = smul.u32 8, %s19
      %v209 = vld [vmem:[%s197] sm:$0xf]
      %v210 = vld [vmem:[%s197 + $0x8] sm:$0xf]
      %v211 = vld [vmem:[%s197 + $0x10] sm:$0xf]
      %v212 = vld [vmem:[%s197 + $0x18] sm:$0xf]
      %v213 = vld [vmem:[%s197 + $0x20] sm:$0xf]
      %v214 = vld [vmem:[%s197 + $0x28] sm:$0xf]
      %v215 = vld [vmem:[%s197 + $0x30] sm:$0xf]
      %v216 = vld [vmem:[%s197 + $0x38] sm:$0xf]
      %v217 = vld [vmem:[%s197 + $0x4] sm:$0x1]
      %v218 = vld [vmem:[%s197 + $0xc] sm:$0x1]
      %v219 = vld [vmem:[%s197 + $0x14] sm:$0x1]
      %v220 = vld [vmem:[%s197 + $0x1c] sm:$0x1]
      %v221 = vld [vmem:[%s197 + $0x24] sm:$0x1]
      %v222 = vld [vmem:[%s197 + $0x2c] sm:$0x1]
      %v223 = vld [vmem:[%s197 + $0x34] sm:$0x1]
      %v224 = vld [vmem:[%s197 + $0x3c] sm:$0x1]
      %v225 = vld [vmem:[%s197] sm:$0xe]
      %v226 = vld [vmem:[%s197 + $0x8] sm:$0xe]
      %v227 = vld [vmem:[%s197 + $0x10] sm:$0xe]
      %v228 = vld [vmem:[%s197 + $0x18] sm:$0xe]
      %v229 = vld [vmem:[%s197 + $0x20] sm:$0xe]
      %v230 = vld [vmem:[%s197 + $0x28] sm:$0xe]
      %v231 = vld [vmem:[%s197 + $0x30] sm:$0xe]
      %v232 = vld [vmem:[%s197 + $0x38] sm:$0xe]
      %s233 = scalar_lea.vmem %s197, 8
      %v234 = vld [vmem:[%s233] sm:$0xf]
      %v235 = vld [vmem:[%s233 + $0x8] sm:$0xf]
      %v236 = vld [vmem:[%s233 + $0x10] sm:$0xf]
      %v237 = vld [vmem:[%s233 + $0x18] sm:$0xf]
      %v238 = vld [vmem:[%s233 + $0x20] sm:$0xf]
      %v239 = vld [vmem:[%s233 + $0x28] sm:$0xf]
      %v240 = vld [vmem:[%s233 + $0x30] sm:$0xf]
      %v241 = vld [vmem:[%s233 + $0x38] sm:$0xf]
      %v242 = vld [vmem:[%s233 + $0x4] sm:$0x1]
      %v243 = vld [vmem:[%s233 + $0xc] sm:$0x1]
      %v244 = vld [vmem:[%s233 + $0x14] sm:$0x1]
      %v245 = vld [vmem:[%s233 + $0x1c] sm:$0x1]
      %v246 = vld [vmem:[%s233 + $0x24] sm:$0x1]
      %v247 = vld [vmem:[%s233 + $0x2c] sm:$0x1]
      %v248 = vld [vmem:[%s233 + $0x34] sm:$0x1]
      %v249 = vld [vmem:[%s233 + $0x3c] sm:$0x1]
      %v250 = vld [vmem:[%s233] sm:$0xe]
      %v251 = vld [vmem:[%s233 + $0x8] sm:$0xe]
      %v252 = vld [vmem:[%s233 + $0x10] sm:$0xe]
      %v253 = vld [vmem:[%s233 + $0x18] sm:$0xe]
      %v254 = vld [vmem:[%s233 + $0x20] sm:$0xe]
      %v255 = vld [vmem:[%s233 + $0x28] sm:$0xe]
      %v256 = vld [vmem:[%s233 + $0x30] sm:$0xe]
      %v257 = vld [vmem:[%s233 + $0x38] sm:$0xe]
      %s258 = scalar_lea.vmem %s197, 16
      %v259 = vld [vmem:[%s258] sm:$0xf]
      %v260 = vld [vmem:[%s258 + $0x8] sm:$0xf]
      %v261 = vld [vmem:[%s258 + $0x10] sm:$0xf]
      %v262 = vld [vmem:[%s258 + $0x18] sm:$0xf]
      %v263 = vld [vmem:[%s258 + $0x20] sm:$0xf]
      %v264 = vld [vmem:[%s258 + $0x28] sm:$0xf]
      %v265 = vld [vmem:[%s258 + $0x30] sm:$0xf]
      %v266 = vld [vmem:[%s258 + $0x38] sm:$0xf]
      %v267 = vld [vmem:[%s258 + $0x4] sm:$0x1]
      %v268 = vld [vmem:[%s258 + $0xc] sm:$0x1]
      %v269 = vld [vmem:[%s258 + $0x14] sm:$0x1]
      %v270 = vld [vmem:[%s258 + $0x1c] sm:$0x1]
      %v271 = vld [vmem:[%s258 + $0x24] sm:$0x1]
      %v272 = vld [vmem:[%s258 + $0x2c] sm:$0x1]
      %v273 = vld [vmem:[%s258 + $0x34] sm:$0x1]
      %v274 = vld [vmem:[%s258 + $0x3c] sm:$0x1]
      %v275 = vld [vmem:[%s258] sm:$0xe]
      %v276 = vld [vmem:[%s258 + $0x8] sm:$0xe]
      %v277 = vld [vmem:[%s258 + $0x10] sm:$0xe]
      %v278 = vld [vmem:[%s258 + $0x18] sm:$0xe]
      %v279 = vld [vmem:[%s258 + $0x20] sm:$0xe]
      %v280 = vld [vmem:[%s258 + $0x28] sm:$0xe]
      %v281 = vld [vmem:[%s258 + $0x30] sm:$0xe]
      %v282 = vld [vmem:[%s258 + $0x38] sm:$0xe]
      %v299 = vunpack.c.l.b16 %v209
      %v300 = vunpack.c.l.b16 %v217
      %v301 = vunpack.c.l.b16 %v210
      %v302 = vunpack.c.l.b16 %v218
      %v303 = vunpack.c.l.b16 %v211
      %v304 = vunpack.c.l.b16 %v219
      %v305 = vunpack.c.l.b16 %v212
      %v306 = vunpack.c.l.b16 %v220
      %v307 = vunpack.c.l.b16 %v213
      %v308 = vunpack.c.l.b16 %v221
      %v309 = vunpack.c.l.b16 %v214
      %v310 = vunpack.c.l.b16 %v222
      %v311 = vunpack.c.l.b16 %v215
      %v312 = vunpack.c.l.b16 %v223
      %v313 = vunpack.c.l.b16 %v216
      %v314 = vunpack.c.l.b16 %v224
      %v315 = vpack.c.b16 %v300, %v299
      %v316 = vpack.c.b16 %v302, %v301
      %v317 = vpack.c.b16 %v304, %v303
      %v318 = vpack.c.b16 %v306, %v305
      %v319 = vpack.c.b16 %v308, %v307
      %v320 = vpack.c.b16 %v310, %v309
      %v321 = vpack.c.b16 %v312, %v311
      %v322 = vpack.c.b16 %v314, %v313
      %v324 = vshrl.u32 %v315, 16
      %v326 = vshll.u32 %v315, 16
      %v328 = vrot.slane %v326, 1
      %v329 = vor.u32 %v324, %v328
      %v331 = vshrl.u32 %v316, 16
      %v333 = vshll.u32 %v316, 16
      %v335 = vrot.slane %v333, 1
      %v336 = vor.u32 %v331, %v335
      %v338 = vshrl.u32 %v317, 16
      %v340 = vshll.u32 %v317, 16
      %v342 = vrot.slane %v340, 1
      %v343 = vor.u32 %v338, %v342
      %v345 = vshrl.u32 %v318, 16
      %v347 = vshll.u32 %v318, 16
      %v349 = vrot.slane %v347, 1
      %v350 = vor.u32 %v345, %v349
      %v352 = vshrl.u32 %v319, 16
      %v354 = vshll.u32 %v319, 16
      %v356 = vrot.slane %v354, 1
      %v357 = vor.u32 %v352, %v356
      %v359 = vshrl.u32 %v320, 16
      %v361 = vshll.u32 %v320, 16
      %v363 = vrot.slane %v361, 1
      %v364 = vor.u32 %v359, %v363
      %v366 = vshrl.u32 %v321, 16
      %v368 = vshll.u32 %v321, 16
      %v370 = vrot.slane %v368, 1
      %v371 = vor.u32 %v366, %v370
      %v373 = vshrl.u32 %v322, 16
      %v375 = vshll.u32 %v322, 16
      %v377 = vrot.slane %v375, 1
      %v378 = vor.u32 %v373, %v377
      %379 = vrot.lane.b32.xlu0 %v329, 16
      %v380 = vpop.permute.xlu0 %379
      %381 = vrot.lane.b32.xlu0 %v336, 16
      %v382 = vpop.permute.xlu0 %381
      %383 = vrot.lane.b32.xlu0 %v343, 16
      %v384 = vpop.permute.xlu0 %383
      %385 = vrot.lane.b32.xlu0 %v350, 16
      %v386 = vpop.permute.xlu0 %385
      %387 = vrot.lane.b32.xlu0 %v357, 16
      %v388 = vpop.permute.xlu0 %387
      %389 = vrot.lane.b32.xlu0 %v364, 16
      %v390 = vpop.permute.xlu0 %389
      %391 = vrot.lane.b32.xlu0 %v371, 16
      %v392 = vpop.permute.xlu0 %391
      %393 = vrot.lane.b32.xlu0 %v378, 16
      %v394 = vpop.permute.xlu0 %393
      %v403 = vunpack.c.l.b16 %v225
      %v404 = vunpack.c.l.b16 %v226
      %v405 = vunpack.c.l.b16 %v227
      %v406 = vunpack.c.l.b16 %v228
      %v407 = vunpack.c.l.b16 %v229
      %v408 = vunpack.c.l.b16 %v230
      %v409 = vunpack.c.l.b16 %v231
      %v410 = vunpack.c.l.b16 %v232
      %v411 = vpack.c.b16 %v300, %v403
      %v412 = vpack.c.b16 %v302, %v404
      %v413 = vpack.c.b16 %v304, %v405
      %v414 = vpack.c.b16 %v306, %v406
      %v415 = vpack.c.b16 %v308, %v407
      %v416 = vpack.c.b16 %v310, %v408
      %v417 = vpack.c.b16 %v312, %v409
      %v418 = vpack.c.b16 %v314, %v410
      %v419 = vrot.slane %v411, 1
      %v420 = vrot.slane %v412, 1
      %v421 = vrot.slane %v413, 1
      %v422 = vrot.slane %v414, 1
      %v423 = vrot.slane %v415, 1
      %v424 = vrot.slane %v416, 1
      %v425 = vrot.slane %v417, 1
      %v426 = vrot.slane %v418, 1
      %427 = vrot.lane.b32.xlu0 %v419, 32
      %v428 = vpop.permute.xlu0 %427
      %429 = vrot.lane.b32.xlu0 %v420, 32
      %v430 = vpop.permute.xlu0 %429
      %431 = vrot.lane.b32.xlu0 %v421, 32
      %v432 = vpop.permute.xlu0 %431
      %433 = vrot.lane.b32.xlu0 %v422, 32
      %v434 = vpop.permute.xlu0 %433
      %435 = vrot.lane.b32.xlu0 %v423, 32
      %v436 = vpop.permute.xlu0 %435
      %437 = vrot.lane.b32.xlu0 %v424, 32
      %v438 = vpop.permute.xlu0 %437
      %439 = vrot.lane.b32.xlu0 %v425, 32
      %v440 = vpop.permute.xlu0 %439
      %441 = vrot.lane.b32.xlu0 %v426, 32
      %v442 = vpop.permute.xlu0 %441
      %v451 = vunpack.c.l.b16 %v234
      %v452 = vunpack.c.l.b16 %v235
      %v453 = vunpack.c.l.b16 %v236
      %v454 = vunpack.c.l.b16 %v237
      %v455 = vunpack.c.l.b16 %v238
      %v456 = vunpack.c.l.b16 %v239
      %v457 = vunpack.c.l.b16 %v240
      %v458 = vunpack.c.l.b16 %v241
      %v459 = vpack.c.b16 %v451, %v451
      %v460 = vpack.c.b16 %v452, %v452
      %v461 = vpack.c.b16 %v453, %v453
      %v462 = vpack.c.b16 %v454, %v454
      %v463 = vpack.c.b16 %v455, %v455
      %v464 = vpack.c.b16 %v456, %v456
      %v465 = vpack.c.b16 %v457, %v457
      %v466 = vpack.c.b16 %v458, %v458
      %467 = vrot.lane.b32.xlu0 %v459, 48
      %v468 = vpop.permute.xlu0 %467
      %469 = vrot.lane.b32.xlu0 %v460, 48
      %v470 = vpop.permute.xlu0 %469
      %471 = vrot.lane.b32.xlu0 %v461, 48
      %v472 = vpop.permute.xlu0 %471
      %473 = vrot.lane.b32.xlu0 %v462, 48
      %v474 = vpop.permute.xlu0 %473
      %475 = vrot.lane.b32.xlu0 %v463, 48
      %v476 = vpop.permute.xlu0 %475
      %477 = vrot.lane.b32.xlu0 %v464, 48
      %v478 = vpop.permute.xlu0 %477
      %479 = vrot.lane.b32.xlu0 %v465, 48
      %v480 = vpop.permute.xlu0 %479
      %481 = vrot.lane.b32.xlu0 %v466, 48
      %v482 = vpop.permute.xlu0 %481
      %v491 = vunpack.c.l.b16 %v242
      %v492 = vunpack.c.l.b16 %v243
      %v493 = vunpack.c.l.b16 %v244
      %v494 = vunpack.c.l.b16 %v245
      %v495 = vunpack.c.l.b16 %v246
      %v496 = vunpack.c.l.b16 %v247
      %v497 = vunpack.c.l.b16 %v248
      %v498 = vunpack.c.l.b16 %v249
      %v499 = vpack.c.b16 %v491, %v451
      %v500 = vpack.c.b16 %v492, %v452
      %v501 = vpack.c.b16 %v493, %v453
      %v502 = vpack.c.b16 %v494, %v454
      %v503 = vpack.c.b16 %v495, %v455
      %v504 = vpack.c.b16 %v496, %v456
      %v505 = vpack.c.b16 %v497, %v457
      %v506 = vpack.c.b16 %v498, %v458
      %v508 = vshrl.u32 %v499, 16
      %v510 = vshll.u32 %v499, 16
      %v512 = vrot.slane %v510, 1
      %v513 = vor.u32 %v508, %v512
      %v515 = vshrl.u32 %v500, 16
      %v517 = vshll.u32 %v500, 16
      %v519 = vrot.slane %v517, 1
      %v520 = vor.u32 %v515, %v519
      %v522 = vshrl.u32 %v501, 16
      %v524 = vshll.u32 %v501, 16
      %v526 = vrot.slane %v524, 1
      %v527 = vor.u32 %v522, %v526
      %v529 = vshrl.u32 %v502, 16
      %v531 = vshll.u32 %v502, 16
      %v533 = vrot.slane %v531, 1
      %v534 = vor.u32 %v529, %v533
      %v536 = vshrl.u32 %v503, 16
      %v538 = vshll.u32 %v503, 16
      %v540 = vrot.slane %v538, 1
      %v541 = vor.u32 %v536, %v540
      %v543 = vshrl.u32 %v504, 16
      %v545 = vshll.u32 %v504, 16
      %v547 = vrot.slane %v545, 1
      %v548 = vor.u32 %v543, %v547
      %v550 = vshrl.u32 %v505, 16
      %v552 = vshll.u32 %v505, 16
      %v554 = vrot.slane %v552, 1
      %v555 = vor.u32 %v550, %v554
      %v557 = vshrl.u32 %v506, 16
      %v559 = vshll.u32 %v506, 16
      %v561 = vrot.slane %v559, 1
      %v562 = vor.u32 %v557, %v561
      %563 = vrot.lane.b32.xlu0 %v513, 64
      %v564 = vpop.permute.xlu0 %563
      %565 = vrot.lane.b32.xlu0 %v520, 64
      %v566 = vpop.permute.xlu0 %565
      %567 = vrot.lane.b32.xlu0 %v527, 64
      %v568 = vpop.permute.xlu0 %567
      %569 = vrot.lane.b32.xlu0 %v534, 64
      %v570 = vpop.permute.xlu0 %569
      %571 = vrot.lane.b32.xlu0 %v541, 64
      %v572 = vpop.permute.xlu0 %571
      %573 = vrot.lane.b32.xlu0 %v548, 64
      %v574 = vpop.permute.xlu0 %573
      %575 = vrot.lane.b32.xlu0 %v555, 64
      %v576 = vpop.permute.xlu0 %575
      %577 = vrot.lane.b32.xlu0 %v562, 64
      %v578 = vpop.permute.xlu0 %577
      %v587 = vunpack.c.l.b16 %v250
      %v588 = vunpack.c.l.b16 %v251
      %v589 = vunpack.c.l.b16 %v252
      %v590 = vunpack.c.l.b16 %v253
      %v591 = vunpack.c.l.b16 %v254
      %v592 = vunpack.c.l.b16 %v255
      %v593 = vunpack.c.l.b16 %v256
      %v594 = vunpack.c.l.b16 %v257
      %v595 = vpack.c.b16 %v491, %v587
      %v596 = vpack.c.b16 %v492, %v588
      %v597 = vpack.c.b16 %v493, %v589
      %v598 = vpack.c.b16 %v494, %v590
      %v599 = vpack.c.b16 %v495, %v591
      %v600 = vpack.c.b16 %v496, %v592
      %v601 = vpack.c.b16 %v497, %v593
      %v602 = vpack.c.b16 %v498, %v594
      %v603 = vrot.slane %v595, 1
      %v604 = vrot.slane %v596, 1
      %v605 = vrot.slane %v597, 1
      %v606 = vrot.slane %v598, 1
      %v607 = vrot.slane %v599, 1
      %v608 = vrot.slane %v600, 1
      %v609 = vrot.slane %v601, 1
      %v610 = vrot.slane %v602, 1
      %611 = vrot.lane.b32.xlu0 %v603, 80
      %v612 = vpop.permute.xlu0 %611
      %613 = vrot.lane.b32.xlu0 %v604, 80
      %v614 = vpop.permute.xlu0 %613
      %615 = vrot.lane.b32.xlu0 %v605, 80
      %v616 = vpop.permute.xlu0 %615
      %617 = vrot.lane.b32.xlu0 %v606, 80
      %v618 = vpop.permute.xlu0 %617
      %619 = vrot.lane.b32.xlu0 %v607, 80
      %v620 = vpop.permute.xlu0 %619
      %621 = vrot.lane.b32.xlu0 %v608, 80
      %v622 = vpop.permute.xlu0 %621
      %623 = vrot.lane.b32.xlu0 %v609, 80
      %v624 = vpop.permute.xlu0 %623
      %625 = vrot.lane.b32.xlu0 %v610, 80
      %v626 = vpop.permute.xlu0 %625
      %v635 = vunpack.c.l.b16 %v259
      %v636 = vunpack.c.l.b16 %v260
      %v637 = vunpack.c.l.b16 %v261
      %v638 = vunpack.c.l.b16 %v262
      %v639 = vunpack.c.l.b16 %v263
      %v640 = vunpack.c.l.b16 %v264
      %v641 = vunpack.c.l.b16 %v265
      %v642 = vunpack.c.l.b16 %v266
      %v643 = vpack.c.b16 %v635, %v635
      %v644 = vpack.c.b16 %v636, %v636
      %v645 = vpack.c.b16 %v637, %v637
      %v646 = vpack.c.b16 %v638, %v638
      %v647 = vpack.c.b16 %v639, %v639
      %v648 = vpack.c.b16 %v640, %v640
      %v649 = vpack.c.b16 %v641, %v641
      %v650 = vpack.c.b16 %v642, %v642
      %651 = vrot.lane.b32.xlu0 %v643, 96
      %v652 = vpop.permute.xlu0 %651
      %653 = vrot.lane.b32.xlu0 %v644, 96
      %v654 = vpop.permute.xlu0 %653
      %655 = vrot.lane.b32.xlu0 %v645, 96
      %v656 = vpop.permute.xlu0 %655
      %657 = vrot.lane.b32.xlu0 %v646, 96
      %v658 = vpop.permute.xlu0 %657
      %659 = vrot.lane.b32.xlu0 %v647, 96
      %v660 = vpop.permute.xlu0 %659
      %661 = vrot.lane.b32.xlu0 %v648, 96
      %v662 = vpop.permute.xlu0 %661
      %663 = vrot.lane.b32.xlu0 %v649, 96
      %v664 = vpop.permute.xlu0 %663
      %665 = vrot.lane.b32.xlu0 %v650, 96
      %v666 = vpop.permute.xlu0 %665
      %v675 = vunpack.c.l.b16 %v267
      %v676 = vunpack.c.l.b16 %v268
      %v677 = vunpack.c.l.b16 %v269
      %v678 = vunpack.c.l.b16 %v270
      %v679 = vunpack.c.l.b16 %v271
      %v680 = vunpack.c.l.b16 %v272
      %v681 = vunpack.c.l.b16 %v273
      %v682 = vunpack.c.l.b16 %v274
      %v683 = vpack.c.b16 %v675, %v635
      %v684 = vpack.c.b16 %v676, %v636
      %v685 = vpack.c.b16 %v677, %v637
      %v686 = vpack.c.b16 %v678, %v638
      %v687 = vpack.c.b16 %v679, %v639
      %v688 = vpack.c.b16 %v680, %v640
      %v689 = vpack.c.b16 %v681, %v641
      %v690 = vpack.c.b16 %v682, %v642
      %v692 = vshrl.u32 %v683, 16
      %v694 = vshll.u32 %v683, 16
      %v696 = vrot.slane %v694, 1
      %v697 = vor.u32 %v692, %v696
      %v699 = vshrl.u32 %v684, 16
      %v701 = vshll.u32 %v684, 16
      %v703 = vrot.slane %v701, 1
      %v704 = vor.u32 %v699, %v703
      %v706 = vshrl.u32 %v685, 16
      %v708 = vshll.u32 %v685, 16
      %v710 = vrot.slane %v708, 1
      %v711 = vor.u32 %v706, %v710
      %v713 = vshrl.u32 %v686, 16
      %v715 = vshll.u32 %v686, 16
      %v717 = vrot.slane %v715, 1
      %v718 = vor.u32 %v713, %v717
      %v720 = vshrl.u32 %v687, 16
      %v722 = vshll.u32 %v687, 16
      %v724 = vrot.slane %v722, 1
      %v725 = vor.u32 %v720, %v724
      %v727 = vshrl.u32 %v688, 16
      %v729 = vshll.u32 %v688, 16
      %v731 = vrot.slane %v729, 1
      %v732 = vor.u32 %v727, %v731
      %v734 = vshrl.u32 %v689, 16
      %v736 = vshll.u32 %v689, 16
      %v738 = vrot.slane %v736, 1
      %v739 = vor.u32 %v734, %v738
      %v741 = vshrl.u32 %v690, 16
      %v743 = vshll.u32 %v690, 16
      %v745 = vrot.slane %v743, 1
      %v746 = vor.u32 %v741, %v745
      %747 = vrot.lane.b32.xlu0 %v697, 112
      %v748 = vpop.permute.xlu0 %747
      %749 = vrot.lane.b32.xlu0 %v704, 112
      %v750 = vpop.permute.xlu0 %749
      %751 = vrot.lane.b32.xlu0 %v711, 112
      %v752 = vpop.permute.xlu0 %751
      %753 = vrot.lane.b32.xlu0 %v718, 112
      %v754 = vpop.permute.xlu0 %753
      %755 = vrot.lane.b32.xlu0 %v725, 112
      %v756 = vpop.permute.xlu0 %755
      %757 = vrot.lane.b32.xlu0 %v732, 112
      %v758 = vpop.permute.xlu0 %757
      %759 = vrot.lane.b32.xlu0 %v739, 112
      %v760 = vpop.permute.xlu0 %759
      %761 = vrot.lane.b32.xlu0 %v746, 112
      %v762 = vpop.permute.xlu0 %761
      %v771 = vunpack.c.l.b16 %v275
      %v772 = vunpack.c.l.b16 %v276
      %v773 = vunpack.c.l.b16 %v277
      %v774 = vunpack.c.l.b16 %v278
      %v775 = vunpack.c.l.b16 %v279
      %v776 = vunpack.c.l.b16 %v280
      %v777 = vunpack.c.l.b16 %v281
      %v778 = vunpack.c.l.b16 %v282
      %v779 = vpack.c.b16 %v675, %v771
      %v780 = vpack.c.b16 %v676, %v772
      %v781 = vpack.c.b16 %v677, %v773
      %v782 = vpack.c.b16 %v678, %v774
      %v783 = vpack.c.b16 %v679, %v775
      %v784 = vpack.c.b16 %v680, %v776
      %v785 = vpack.c.b16 %v681, %v777
      %v786 = vpack.c.b16 %v682, %v778
      %v787 = vrot.slane %v779, 1
      %v788 = vrot.slane %v780, 1
      %v789 = vrot.slane %v781, 1
      %v790 = vrot.slane %v782, 1
      %v791 = vrot.slane %v783, 1
      %v792 = vrot.slane %v784, 1
      %v793 = vrot.slane %v785, 1
      %v794 = vrot.slane %v786, 1
      %vm795 = vcmask 130048
      %v798 = vsel %vm795, %v209, %v380
      %v801 = vsel %vm795, %v210, %v382
      %v804 = vsel %vm795, %v211, %v384
      %v807 = vsel %vm795, %v212, %v386
      %v810 = vsel %vm795, %v213, %v388
      %v813 = vsel %vm795, %v214, %v390
      %v816 = vsel %vm795, %v215, %v392
      %v819 = vsel %vm795, %v216, %v394
      %vm820 = vcmask 261120
      %v822 = vsel %vm820, %v798, %v428
      %v824 = vsel %vm820, %v801, %v430
      %v826 = vsel %vm820, %v804, %v432
      %v828 = vsel %vm820, %v807, %v434
      %v830 = vsel %vm820, %v810, %v436
      %v832 = vsel %vm820, %v813, %v438
      %v834 = vsel %vm820, %v816, %v440
      %v836 = vsel %vm820, %v819, %v442
      %vm837 = vcmask 392192
      %v839 = vsel %vm837, %v822, %v468
      %v841 = vsel %vm837, %v824, %v470
      %v843 = vsel %vm837, %v826, %v472
      %v845 = vsel %vm837, %v828, %v474
      %v847 = vsel %vm837, %v830, %v476
      %v849 = vsel %vm837, %v832, %v478
      %v851 = vsel %vm837, %v834, %v480
      %v853 = vsel %vm837, %v836, %v482
      %vm854 = vcmask 523264
      %v856 = vsel %vm854, %v839, %v564
      %v858 = vsel %vm854, %v841, %v566
      %v860 = vsel %vm854, %v843, %v568
      %v862 = vsel %vm854, %v845, %v570
      %v864 = vsel %vm854, %v847, %v572
      %v866 = vsel %vm854, %v849, %v574
      %v868 = vsel %vm854, %v851, %v576
      %v870 = vsel %vm854, %v853, %v578
      %vm871 = vcmask 654336
      %v873 = vsel %vm871, %v856, %v612
      %v875 = vsel %vm871, %v858, %v614
      %v877 = vsel %vm871, %v860, %v616
      %v879 = vsel %vm871, %v862, %v618
      %v881 = vsel %vm871, %v864, %v620
      %v883 = vsel %vm871, %v866, %v622
      %v885 = vsel %vm871, %v868, %v624
      %v887 = vsel %vm871, %v870, %v626
      %vm888 = vcmask 785408
      %v890 = vsel %vm888, %v873, %v652
      %v892 = vsel %vm888, %v875, %v654
      %v894 = vsel %vm888, %v877, %v656
      %v896 = vsel %vm888, %v879, %v658
      %v898 = vsel %vm888, %v881, %v660
      %v900 = vsel %vm888, %v883, %v662
      %v902 = vsel %vm888, %v885, %v664
      %v904 = vsel %vm888, %v887, %v666
      %vm905 = vcmask 916480
      %v907 = vsel %vm905, %v890, %v748
      %v909 = vsel %vm905, %v892, %v750
      %v911 = vsel %vm905, %v894, %v752
      %v913 = vsel %vm905, %v896, %v754
      %v915 = vsel %vm905, %v898, %v756
      %v917 = vsel %vm905, %v900, %v758
      %v919 = vsel %vm905, %v902, %v760
      %v921 = vsel %vm905, %v904, %v762
      %v930 = vunpack.c.l.b16 %v907
      %v931 = vunpack.c.l.b16 %v787
      %v932 = vunpack.c.l.b16 %v909
      %v933 = vunpack.c.l.b16 %v788
      %v934 = vunpack.c.l.b16 %v911
      %v935 = vunpack.c.l.b16 %v789
      %v936 = vunpack.c.l.b16 %v913
      %v937 = vunpack.c.l.b16 %v790
      %v938 = vunpack.c.l.b16 %v915
      %v939 = vunpack.c.l.b16 %v791
      %v940 = vunpack.c.l.b16 %v917
      %v941 = vunpack.c.l.b16 %v792
      %v942 = vunpack.c.l.b16 %v919
      %v943 = vunpack.c.l.b16 %v793
      %v944 = vunpack.c.l.b16 %v921
      %v945 = vunpack.c.l.b16 %v794
      %v946 = vld [vmem:[%s1] sm:$0xf]
      %v947 = vld [vmem:[%s1 + $0x4] sm:$0xf]
      %v948 = vld [vmem:[%s1 + $0x8] sm:$0xf]
      %v949 = vld [vmem:[%s1 + $0xc] sm:$0xf]
      %v950 = vld [vmem:[%s1 + $0x10] sm:$0xf]
      %v951 = vld [vmem:[%s1 + $0x14] sm:$0xf]
      %v952 = vld [vmem:[%s1 + $0x18] sm:$0xf]
      %v953 = vld [vmem:[%s1 + $0x1c] sm:$0xf]
      %v954 = vld [vmem:[%s1 + $0x20] sm:$0xf]
      %v955 = vld [vmem:[%s1 + $0x24] sm:$0xf]
      %v956 = vld [vmem:[%s1 + $0x28] sm:$0xf]
      %v957 = vld [vmem:[%s1 + $0x2c] sm:$0xf]
      %v958 = vld [vmem:[%s1 + $0x30] sm:$0xf]
      %v959 = vld [vmem:[%s1 + $0x34] sm:$0xf]
      %v960 = vld [vmem:[%s1 + $0x38] sm:$0xf]
      %v961 = vld [vmem:[%s1 + $0x3c] sm:$0xf]
      %v962 = vld [vmem:[%s1 + $0x40] sm:$0xf]
      %v963 = vld [vmem:[%s1 + $0x44] sm:$0xf]
      %v964 = vld [vmem:[%s2] sm:$0x1]
      %v966 = vlaneseq
      %v967 = vshrl.u32 %v966, 7
      %v968 = vsub.s32 0, %v967
      %v969 = vrot.slane %v964, %v968
      %v971 = vpack.c.b16 %v932, %v930
      %v972 = vpack.c.b16 %v933, %v931
      %v973 = vpack.c.b16 %v936, %v934
      %v974 = vpack.c.b16 %v937, %v935
      %v975 = vpack.c.b16 %v940, %v938
      %v976 = vpack.c.b16 %v941, %v939
      %v977 = vpack.c.b16 %v944, %v942
      %v978 = vpack.c.b16 %v945, %v943
      %v1001 = vunpack.c.l.b16 %v946
      %v1002 = vunpack.c.l.b16 %v947
      %v1003 = vunpack.c.l.b16 %v948
      %v1004 = vunpack.c.l.b16 %v949
      %v1005 = vunpack.c.l.b16 %v950
      %v1006 = vunpack.c.l.b16 %v951
      %v1007 = vunpack.c.l.b16 %v952
      %v1008 = vunpack.c.l.b16 %v953
      %v1009 = vunpack.c.l.b16 %v954
      %v1010 = vunpack.c.l.b16 %v955
      %v1011 = vunpack.c.l.b16 %v956
      %v1012 = vunpack.c.l.b16 %v957
      %v1013 = vunpack.c.l.b16 %v958
      %v1014 = vunpack.c.l.b16 %v959
      %v1015 = vunpack.c.l.b16 %v960
      %v1016 = vunpack.c.l.b16 %v961
      %v1017 = vunpack.c.l.b16 %v962
      %v1018 = vunpack.c.l.b16 %v963
      %v1019 = vpack.c.b16 %v1002, %v1001
      %v1020 = vpack.c.b16 %v1004, %v1003
      %v1021 = vpack.c.b16 %v1006, %v1005
      %v1022 = vpack.c.b16 %v1008, %v1007
      %v1023 = vpack.c.b16 %v1010, %v1009
      %v1024 = vpack.c.b16 %v1012, %v1011
      %v1025 = vpack.c.b16 %v1014, %v1013
      %v1026 = vpack.c.b16 %v1016, %v1015
      %v1027 = vpack.c.b16 %v1018, %v1017
      %v1038 = vsel %vm795, %v972, 0
      %v1041 = vsel %vm795, %v974, 0
      %v1044 = vsel %vm795, %v976, 0
      %v1047 = vsel %vm795, %v978, 0
      %1049 = vmatprep.subr.bf16.mxu0 0
      %1050 = vmatpush1.bf16.msra.mxu0 %v1019
      %1051 = vmatprep.subr.bf16.mxu0 0
      %1052 = vmatpush1.bf16.msra.mxu0 %v1020
      %1053 = vmatprep.subr.bf16.mxu0 0
      %1054 = vmatpush1.bf16.msra.mxu0 %v1021
      %1055 = vmatprep.subr.bf16.mxu0 0
      %1056 = vmatpush1.bf16.msra.mxu0 %v1022
      %1057 = vmatprep.subr.bf16.mxu0 0
      %1058 = vmatpush1.bf16.msra.mxu0 %v1023
      %1059 = vmatprep.subr.bf16.mxu0 0
      %1060 = vmatpush1.bf16.msra.mxu0 %v1024
      %1061 = vmatprep.subr.bf16.mxu0 0
      %1062 = vmatpush1.bf16.msra.mxu0 %v1025
      %1063 = vmatprep.subr.bf16.mxu0 0
      %1064 = vmatpush1.bf16.msra.mxu0 %v1026
      %1065 = vmatprep.subr.bf16.mxu0 0
      %1066 = vmatpush1.bf16.msra.mxu0 %v1027
      %1067 = vmatprep.subr.bf16.mxu0 0
      %1068 = vmatpush1.bf16.msra.mxu0 0
      %1069 = vmatprep.subr.bf16.mxu0 0
      %1070 = vmatpush1.bf16.msra.mxu0 0
      %1071 = vmatprep.subr.bf16.mxu0 0
      %1072 = vmatpush1.bf16.msra.mxu0 0
      %1073 = vmatprep.subr.bf16.mxu0 0
      %1074 = vmatpush1.bf16.msra.mxu0 0
      %1075 = vmatprep.subr.bf16.mxu0 0
      %1076 = vmatpush1.bf16.msra.mxu0 0
      %1077 = vmatprep.subr.bf16.mxu0 0
      %1078 = vmatpush1.bf16.msra.mxu0 0
      %1079 = vmatprep.subr.bf16.mxu0 0
      %1080 = vmatpush1.bf16.msra.mxu0 0
      %1081 = vmatprep.mubr.bf16.mxu0 %v1038
      %1082 = vmatmul.mubr.bf16.gmra.mrb[0].mxu0 %v971
      %v1083 = vpop.f32.mrb[0].mxu0
      %v1084 = vadd.f32 %v969, %v1083
      %v1085 = vpop.f32.mrb[0].mxu0
      %v1086 = vpop.f32.mrb[0].mxu0
      %v1087 = vadd.f32 %v969, %v1086
      %v1088 = vpop.f32.mrb[0].mxu0
      %1089 = vmatprep.mubr.bf16.mxu0 %v1041
      %1090 = vmatmul.mubr.bf16.gmra.mrb[0].mxu0 %v973
      %v1091 = vpop.f32.mrb[0].mxu0
      %v1092 = vadd.f32 %v969, %v1091
      %v1093 = vpop.f32.mrb[0].mxu0
      %v1094 = vpop.f32.mrb[0].mxu0
      %v1095 = vadd.f32 %v969, %v1094
      %v1096 = vpop.f32.mrb[0].mxu0
      %1097 = vmatprep.mubr.bf16.mxu0 %v1044
      %1098 = vmatmul.mubr.bf16.gmra.mrb[0].mxu0 %v975
      %v1099 = vpop.f32.mrb[0].mxu0
      %v1100 = vadd.f32 %v969, %v1099
      %v1101 = vpop.f32.mrb[0].mxu0
      %v1102 = vpop.f32.mrb[0].mxu0
      %v1103 = vadd.f32 %v969, %v1102
      %v1104 = vpop.f32.mrb[0].mxu0
      %1105 = vmatprep.mubr.bf16.mxu0 %v1047
      %1106 = vmatmul.mubr.bf16.gmra.mrb[0].mxu0 %v977
      %v1107 = vpop.f32.mrb[0].mxu0
      %v1108 = vadd.f32 %v969, %v1107
      %v1109 = vpop.f32.mrb[0].mxu0
      %v1110 = vpop.f32.mrb[0].mxu0
      %v1111 = vadd.f32 %v969, %v1110
      %v1112 = vpop.f32.mrb[0].mxu0
      %1113 = vdwg.mxu0
      %vm1114 = vcmp.ge.f32.partialorder %v1084, 0.0
      %vm1115 = vcmp.ge.f32.partialorder %v1087, 0.0
      %vm1116 = vcmp.ge.f32.partialorder %v1092, 0.0
      %vm1117 = vcmp.ge.f32.partialorder %v1095, 0.0
      %vm1118 = vcmp.ge.f32.partialorder %v1100, 0.0
      %vm1119 = vcmp.ge.f32.partialorder %v1103, 0.0
      %vm1120 = vcmp.ge.f32.partialorder %v1108, 0.0
      %vm1121 = vcmp.ge.f32.partialorder %v1111, 0.0
      %v1122 = vmul.f32 %v1084, 0.2
      %v1123 = vmul.f32 %v1087, 0.2
      %v1124 = vmul.f32 %v1092, 0.2
      %v1125 = vmul.f32 %v1095, 0.2
      %v1126 = vmul.f32 %v1100, 0.2
      %v1127 = vmul.f32 %v1103, 0.2
      %v1128 = vmul.f32 %v1108, 0.2
      %v1129 = vmul.f32 %v1111, 0.2
      %v1130 = vsel %vm1114, %v1084, %v1122
      %v1131 = vsel %vm1115, %v1087, %v1123
      %v1132 = vsel %vm1116, %v1092, %v1124
      %v1133 = vsel %vm1117, %v1095, %v1125
      %v1134 = vsel %vm1118, %v1100, %v1126
      %v1135 = vsel %vm1119, %v1103, %v1127
      %v1136 = vsel %vm1120, %v1108, %v1128
      %v1137 = vsel %vm1121, %v1111, %v1129
      %v1138 = vpack.c.bf16 %v1130, %v1130
      %v1139 = vpack.c.bf16 %v1131, %v1131
      %v1140 = vpack.c.bf16 %v1132, %v1132
      %v1141 = vpack.c.bf16 %v1133, %v1133
      %v1142 = vpack.c.bf16 %v1134, %v1134
      %v1143 = vpack.c.bf16 %v1135, %v1135
      %v1144 = vpack.c.bf16 %v1136, %v1136
      %v1145 = vpack.c.bf16 %v1137, %v1137
      %1146 = vst [vmem:[%s206] sm:$0xf] %v1138
      %1147 = vst [vmem:[%s206 + $0x4] sm:$0xf] %v1139
      %1148 = vst [vmem:[%s206 + $0x8] sm:$0xf] %v1140
      %1149 = vst [vmem:[%s206 + $0xc] sm:$0xf] %v1141
      %1150 = vst [vmem:[%s206 + $0x10] sm:$0xf] %v1142
      %1151 = vst [vmem:[%s206 + $0x14] sm:$0xf] %v1143
      %1152 = vst [vmem:[%s206 + $0x18] sm:$0xf] %v1144
      %1153 = vst [vmem:[%s206 + $0x1c] sm:$0xf] %v1145
      %s1154 = smul.u32 8, %s19
      %p1155 = scmp.lt.s32.totalorder %s18, 1
      %s1156 = scalar_select %p1155, %s18, 1
      %p1157 = scmp.lt.s32.totalorder %s1154, 7
      %s1158 = scalar_select %p1157, %s1154, 7
      %s1159 = smul.addr %s1156, 8
      %s1160 = sadd.s32 %s1158, %s1159
      %s1161 = smul.addr %s1160, 4
      %s1162 = scalar_lea.vmem %s3, %s1161
      // Predicated region
      $region33: #{dconv_forward.1} parent=31 // pred_check
        %p1163 = pneg %p116
      $region34: #{dconv_forward.1} parent=31 // pred_check_branch
        %1165 = sbr.rel (%p1163) target = $region36
      $region35: #{dconv_forward.1} parent=31 // pred_region
        %s1166 = smul.u32 8, %s19
      $region36: #{dconv_forward.1} parent=31 // pred_fallthru
        _
    $region32: #{dconv_forward.1} parent=5 // pred_fallthru
      _
    %p1167 = scmp.le.s32.totalorder 2, %s9
    // Predicated region
    $region37: #{dconv_forward.1} parent=5 // pred_check
      %p1168 = pneg %p1167
    $region38: #{dconv_forward.1} parent=5 // pred_check_branch
      %1170 = sbr.rel (%p1168) target = $region40
    $region39: #{dconv_forward.1} parent=5 // pred_region
      %s1171 = ssub.s32 %s9, 2
      // Predicated region
      $region41: #{dconv_forward.1} parent=39 // pred_check
        %p1172 = pneg %p122
      $region42: #{dconv_forward.1} parent=39 // pred_check_branch
        %1174 = sbr.rel (%p1172) target = $region44
      $region43: #{dconv_forward.1} parent=39 // pred_region
        %s1175 = smul.u32 8, %s21
        %p1176 = scmp.lt.s32.totalorder %s20, 1
        %s1177 = scalar_select %p1176, %s20, 1
        %p1178 = scmp.lt.s32.totalorder %s1175, 7
        %s1179 = scalar_select %p1178, %s1175, 7
        %s1180 = smul.addr %s1177, 8
        %s1181 = sadd.s32 %s1179, %s1180
        %s1182 = smul.addr %s1181, 4
        %s1183 = scalar_lea.vmem %s3, %s1182
      $region44: #{dconv_forward.1} parent=39 // pred_fallthru
        _
    $region40: #{dconv_forward.1} parent=5 // pred_fallthru
      _
  $region6: #{dconv_forward.1} parent=0 // loop_footer
    %s13 = sadd.s32 1, %s9
  $region7: #{dconv_forward.1} parent=0 // loop_footer_branch
    %8 = sbr.rel target = $region3
  $region8: #{dconv_forward.1} parent=0 // loop_exit
    _

</llo_original>
